<compile_context>
chip_gen: v6e
topology: v6e:2x2x1
jax: 0.10.0
libtpu: 0.0.40
codegen_flags: <defaults>
</compile_context>

<pallas_src>
import jax
import jax.numpy as jnp
from jax import lax
from jax.experimental import pallas as pl
from jax.experimental.pallas import tpu as pltpu


def _rand_uniform_kernel(seed_ref, rand_ref):
    """x = torch.rand_like(x): uniform [0, 1) float32 per element.

    Stateless hash of (seed ^ element index); no hardware PRNG primitives so the
    kernel also runs under the CPU/interpret fallback.
    """
    rows, cols = rand_ref.shape
    col_bits = (cols - 1).bit_length()            # cols is a power of two

    r = lax.broadcasted_iota(jnp.int32, (rows, cols), 0)
    c = lax.broadcasted_iota(jnp.int32, (rows, cols), 1)
    h = (r << col_bits) | c                       # unique per-element counter
    h = h ^ seed_ref[0]

    # Mixing rounds: add / xor / shift only (no integer multiplies).
    h = h + jnp.int32(-1640531527)                # 0x9E3779B9 (golden-ratio Weyl step)
    h = h ^ (h << 13)
    h = h ^ lax.shift_right_logical(h, jnp.int32(17))
    h = h ^ (h << 5)
    h = h + jnp.int32(0x7F4A7C15)
    h = h ^ lax.shift_right_logical(h, jnp.int32(16))
    h = h ^ (h << 7)
    h = h ^ lax.shift_right_logical(h, jnp.int32(9))

    # Exponent-splice: 23 random mantissa bits OR'd with exponent of 1.0 -> [1,2);
    # subtract 1.0 -> [0,1).  Avoids int->float convert + scale multiply.
    mant = lax.shift_right_logical(h, jnp.int32(9)) | jnp.int32(0x3F800000)
    rand_ref[...] = lax.bitcast_convert_type(mant, jnp.float32) - 1.0


def model_forward(x_nchw, seed):
    """Pallas equivalent of Model.forward.

    The torch forward returns the Python int 1; every tensor it builds is dead.
    The dead a1*x + a2*x path (and therefore the x-input DMA) is removed per the
    perf review; only rand_like(x) is still produced so the caller can block on
    real device work.  The output is presented as a lane-dense (8, total//8)
    f32 slab (last dim a multiple of 128 -> unmasked full-width stores) and
    reshaped back to NCHW in the wrapper.
    """
    n, c, h, w = x_nchw.shape
    total = n * c * h * w
    rows = 8                                      # exactly one sublane tile
    cols = total // rows
    assert rows * cols == total
    assert cols % 128 == 0 and (cols & (cols - 1)) == 0, "need lane-dense pow2 cols"

    seed_arr = jnp.asarray([seed], dtype=jnp.int32)

    rand2d = pl.pallas_call(
        _rand_uniform_kernel,
        out_shape=jax.ShapeDtypeStruct((rows, cols), jnp.float32),
        in_specs=[pl.BlockSpec(memory_space=pltpu.MemorySpace.SMEM)],   # seed scalar
        out_specs=pl.BlockSpec(memory_space=pltpu.MemorySpace.VMEM),    # rand slab
        # Single ungridded invocation: 8 KiB of output is launch-bound; any grid,
        # pipelining depth or multi-TC split would only add per-step overhead.
    )(seed_arr)

    # The PyTorch module's forward returns the Python integer 1.
    return 1, rand2d.reshape(n, c, h, w)


def _simulate_init_dropout(key, p1, p=0.5):
    """Deterministic stand-in for F.dropout(p1) in __init__ (training=True)."""
    keep = jax.random.bernoulli(key, 1.0 - p, shape=p1.shape)
    return jnp.where(keep, p1 / (1.0 - p), 0.0)[0]


if __name__ == "__main__":
    key = jax.random.PRNGKey(0)
    k_p1, k_d1, k_d2, k_x = jax.random.split(key, 4)

    # __init__: p1 = torch.randn(1); a1 = F.dropout(p1); a2 = F.dropout(p1)
    p1 = jax.random.normal(k_p1, (1,), dtype=jnp.float32)
    a1 = _simulate_init_dropout(k_d1, p1)
    a2 = _simulate_init_dropout(k_d2, p1)
    # TODO(synk): a1/a2 feed only the dead `a1(x)+a2(x)` line in forward (its
    # result is overwritten by rand_like and forward returns 1), so per the perf
    # review that compute is intentionally not lowered to the kernel.
    del a1, a2

    # input x: NCHW (2, 4, 16, 16) — used only for shape (rand_like).
    x = jax.random.normal(k_x, (2, 4, 16, 16), dtype=jnp.float32)

    result, rand_tensor = model_forward(x, seed=1234)
    jax.block_until_ready(rand_tensor)

    assert result == 1
    assert rand_tensor.shape == x.shape
    assert bool(jnp.all(rand_tensor >= 0.0)) and bool(jnp.all(rand_tensor < 1.0))
    # Values should not be degenerate (hash mixer is bijective per element).
    assert int(jnp.unique(rand_tensor).size) > 1
    print("KERNEL_OK")
</pallas_src>

<mosaic_0001>
module attributes {stable_mosaic.version = 11 : i64} {
  func.func @_rand_uniform_kernel(%arg0: memref<1xi32, #tpu.memory_space<smem>>, %arg1: memref<8x256xf32, #tpu.memory_space<vmem>>) attributes {dimension_semantics = [], scalar_prefetch = 0 : i64, scratch_operands = 0 : i64, tpu.core_type = #tpu.core_type<tc>} {
    %0 = tpu.iota {dimensions = array<i32: 0>} : vector<8x256xi32>
    %1 = tpu.iota {dimensions = array<i32: 1>} : vector<8x256xi32>
    %c8_i32 = arith.constant 8 : i32
    %2 = vector.broadcast %c8_i32 : i32 to vector<8x256xi32>
    %3 = arith.shli %0, %2 : vector<8x256xi32>
    %4 = arith.ori %3, %1 : vector<8x256xi32>
    %c0 = arith.constant 0 : index
    %5 = memref.load %arg0[%c0] : memref<1xi32, #tpu.memory_space<smem>>
    %6 = vector.broadcast %5 : i32 to vector<8x256xi32>
    %7 = arith.xori %4, %6 : vector<8x256xi32>
    %c-1640531527_i32 = arith.constant -1640531527 : i32
    %8 = vector.broadcast %c-1640531527_i32 : i32 to vector<8x256xi32>
    %9 = arith.addi %7, %8 : vector<8x256xi32>
    %c13_i32 = arith.constant 13 : i32
    %10 = vector.broadcast %c13_i32 : i32 to vector<8x256xi32>
    %11 = arith.shli %9, %10 : vector<8x256xi32>
    %12 = arith.xori %9, %11 : vector<8x256xi32>
    %c17_i32 = arith.constant 17 : i32
    %13 = vector.broadcast %c17_i32 : i32 to vector<8x256xi32>
    %14 = arith.shrui %12, %13 : vector<8x256xi32>
    %15 = arith.xori %12, %14 : vector<8x256xi32>
    %c5_i32 = arith.constant 5 : i32
    %16 = vector.broadcast %c5_i32 : i32 to vector<8x256xi32>
    %17 = arith.shli %15, %16 : vector<8x256xi32>
    %18 = arith.xori %15, %17 : vector<8x256xi32>
    %c2135587861_i32 = arith.constant 2135587861 : i32
    %19 = vector.broadcast %c2135587861_i32 : i32 to vector<8x256xi32>
    %20 = arith.addi %18, %19 : vector<8x256xi32>
    %c16_i32 = arith.constant 16 : i32
    %21 = vector.broadcast %c16_i32 : i32 to vector<8x256xi32>
    %22 = arith.shrui %20, %21 : vector<8x256xi32>
    %23 = arith.xori %20, %22 : vector<8x256xi32>
    %c7_i32 = arith.constant 7 : i32
    %24 = vector.broadcast %c7_i32 : i32 to vector<8x256xi32>
    %25 = arith.shli %23, %24 : vector<8x256xi32>
    %26 = arith.xori %23, %25 : vector<8x256xi32>
    %c9_i32 = arith.constant 9 : i32
    %27 = vector.broadcast %c9_i32 : i32 to vector<8x256xi32>
    %28 = arith.shrui %26, %27 : vector<8x256xi32>
    %29 = arith.xori %26, %28 : vector<8x256xi32>
    %c9_i32_0 = arith.constant 9 : i32
    %30 = vector.broadcast %c9_i32_0 : i32 to vector<8x256xi32>
    %31 = arith.shrui %29, %30 : vector<8x256xi32>
    %c1065353216_i32 = arith.constant 1065353216 : i32
    %32 = vector.broadcast %c1065353216_i32 : i32 to vector<8x256xi32>
    %33 = arith.ori %31, %32 : vector<8x256xi32>
    %34 = tpu.bitcast %33 : vector<8x256xi32> -> vector<8x256xf32>
    %cst = arith.constant 1.000000e+00 : f32
    %35 = vector.broadcast %cst : f32 to vector<8x256xf32>
    %36 = arith.subf %34, %35 : vector<8x256xf32>
    %c0_1 = arith.constant 0 : index
    %c0_2 = arith.constant 0 : index
    %37 = vector.load %arg1[%c0_1, %c0_2] : memref<8x256xf32, #tpu.memory_space<vmem>>, vector<8x256xf32>
    tpu.vector_store %arg1[%c0_1, %c0_2], %36 {strides = array<i32>} : memref<8x256xf32, #tpu.memory_space<vmem>>, vector<8x256xf32>,
    return
  }
}

</mosaic_0001>

<llo_original>
// kernel: tpu_custom_call.1
$region0: #{tpu_custom_call.1}
  #allocation0 [shape = 'u32[]', space=smem, size = 0x4, offset = 0x4, fixed_abs, tag = 'smem constant byte address 0x4 - core index']
  #allocation1 [shape = 'u32[144,128]{1,0:T(1,128)}', space=vmem, size = 0x12000, scoped, tag = 'internal scratch']
  #allocation2 [shape = 's32[1]{0:T(128)S(6)}', space=smem, size = 0x200, scoped, tag = 'scoped memory for tpu_custom_call.1']
  %s0 = inlined_call_operand.<no memory space> [shape: s32[1], index: 0, kind: input, shape index: {}]
  %s1 = inlined_call_operand.hbm [shape: f32[8,256], index: 1, kind: output, shape index: {}]
  %s2 = sld [smem:[#allocation0]]
  $region14: #{tpu_custom_call.1} parent=0
    _
  %s4 = ssub.s32 1, %s2
  %s5 = scalar_select 0, %s4, %s2
  %6 = sst [smem:[#allocation2]] %s0
  $region1: #{tpu_custom_call.1} parent=0
    #allocation3 [shape = 'u8[8192]{0}', space=vmem, size = 0x2000, scoped, tag = 'output window, operand 0, single buffered']
    #allocation4 [shape = 's32[1]{0}', space=sflag, size = 0x4, scoped, tag = 'scoped memory for tpu_custom_call.1']
    %7 = vsyncpa [#allocation4], 0
    // Predicated region
    $region2: #{tpu_custom_call.1} parent=1 // pred_check
      _
    $region3: #{tpu_custom_call.1} parent=1 // pred_check_branch
      %9 = sbr.rel (0) target = $region5
    $region4: #{tpu_custom_call.1} parent=1 // pred_region
      _
    $region5: #{tpu_custom_call.1} parent=1 // pred_fallthru
      _
    %v10 = vlaneseq
    %v11 = vshrl.u32 %v10, 7
    %v12 = vlaneseq
    %v13 = vand.u32 %v12, 127
    %v14 = vadd.s32 %v13, 128
    %v15 = vshll.u32 %v11, 8
    %v16 = vor.u32 %v15, %v13
    %v17 = vor.u32 %v15, %v14
    %s18 = sld [smem:[#allocation2]]
    %v19 = vstv %s18
    %v20 = vxor.u32 %v16, %v19
    %v21 = vxor.u32 %v17, %v19
    %v22 = vadd.s32 %v20, 2654435769
    %v23 = vadd.s32 %v21, 2654435769
    %v24 = vshll.u32 %v22, 13
    %v25 = vshll.u32 %v23, 13
    %v26 = vxor.u32 %v22, %v24
    %v27 = vxor.u32 %v23, %v25
    %v28 = vshrl.u32 %v26, 17
    %v29 = vshrl.u32 %v27, 17
    %v30 = vxor.u32 %v26, %v28
    %v31 = vxor.u32 %v27, %v29
    %v32 = vshll.u32 %v30, 5
    %v33 = vshll.u32 %v31, 5
    %v34 = vxor.u32 %v30, %v32
    %v35 = vxor.u32 %v31, %v33
    %v36 = vadd.s32 %v34, 2135587861
    %v37 = vadd.s32 %v35, 2135587861
    %v38 = vshrl.u32 %v36, 16
    %v39 = vshrl.u32 %v37, 16
    %v40 = vxor.u32 %v36, %v38
    %v41 = vxor.u32 %v37, %v39
    %v42 = vshll.u32 %v40, 7
    %v43 = vshll.u32 %v41, 7
    %v44 = vxor.u32 %v40, %v42
    %v45 = vxor.u32 %v41, %v43
    %v46 = vshrl.u32 %v44, 9
    %v47 = vshrl.u32 %v45, 9
    %v48 = vxor.u32 %v44, %v46
    %v49 = vxor.u32 %v45, %v47
    %v50 = vshrl.u32 %v48, 9
    %v51 = vshrl.u32 %v49, 9
    %v52 = vor.u32 %v50, 1065353216
    %v53 = vor.u32 %v51, 1065353216
    %v56 = vsub.f32 %v52, 1.0
    %v57 = vsub.f32 %v53, 1.0
    %58 = vst [vmem:[#allocation3] sm:$0xff] %v56
    %59 = vst [vmem:[#allocation3 + $0x8] sm:$0xff] %v57
    // Predicated region
    $region6: #{tpu_custom_call.1} parent=1 // pred_check
      _
    $region7: #{tpu_custom_call.1} parent=1 // pred_check_branch
      %61 = sbr.rel (0) target = $region9
    $region8: #{tpu_custom_call.1} parent=1 // pred_region
      %s63 = ssub.s32 256, 256
      %64 = vsyncadd [#allocation4], %s63
      %s66 = sshll.u32 [#allocation3], 4
      %s67 = int_to_ptr.vmem [resolvable:$true] %s66
      %69 = dma.vmem_to_hbm [thread:$0]  %s67, 256, %s1, [#allocation4]
    $region9: #{tpu_custom_call.1} parent=1 // pred_fallthru
      _
    // Predicated region
    $region10: #{tpu_custom_call.1} parent=1 // pred_check
      _
    $region11: #{tpu_custom_call.1} parent=1 // pred_check_branch
      %71 = sbr.rel (0) target = $region13
    $region12: #{tpu_custom_call.1} parent=1 // pred_region
      %72 = dma.done [#allocation4], 256
    $region13: #{tpu_custom_call.1} parent=1 // pred_fallthru
      _
    %73 = vsyncpa [#allocation4], 1

</llo_original>
